<compile_context>
chip_gen: v7x
topology: tpu7x:2x2x1
jax: 0.10.0
libtpu: 0.0.40
codegen_flags: <defaults>
</compile_context>

<pallas_src>
import functools

import jax
import jax.numpy as jnp
from jax import lax
from jax.experimental import pallas as pl
from jax.experimental.pallas import tpu as pltpu


def _cluster_assignment_kernel(z_ref, c_ref, cn2_ref, q_ref, *, alpha: float):
    """One N-tile per grid step.

    z_ref  : (TILE_N, D)  streamed embeddings
    c_ref  : (K, D)       centroids (VMEM-resident across the grid)
    cn2_ref: (1, K)       precomputed ||c_k||^2 (VMEM-resident)
    q_ref  : (TILE_N, K)  soft assignments for this tile
    """
    z = z_ref[...].astype(jnp.float32)          # (TN, D)
    c = c_ref[...].astype(jnp.float32)          # (K, D)
    cn2 = cn2_ref[...]                          # (1, K)

    # ||z_n||^2 exactly on the VPU/XLU: O(TN*D), negligible next to the z DMA.
    zn2 = jnp.sum(z * z, axis=1, keepdims=True)             # (TN, 1)

    # z . c^T on the MXU, contracting D, f32 accumulation / f32 contraction.
    cross = lax.dot_general(
        z, c, (((1,), (1,)), ((), ())),
        preferred_element_type=jnp.float32,
        precision=lax.Precision.HIGHEST,
    )                                                        # (TN, K)

    # Squared distances; clamp tiny negatives from cancellation.
    diff = jnp.maximum(zn2 + cn2 - 2.0 * cross, 0.0)         # (TN, K)

    inv_alpha = 1.0 / alpha
    scaled = diff if inv_alpha == 1.0 else diff * inv_alpha
    num = 1.0 / (1.0 + scaled)                               # (TN, K)

    # (alpha + 1) / 2 is a trace-time Python constant: specialise.
    power = (alpha + 1.0) / 2.0
    if power != 1.0:
        if float(power).is_integer() and 2.0 <= power <= 4.0:
            acc = num
            for _ in range(int(power) - 1):
                acc = acc * num
            num = acc
        else:
            num = num ** power                               # general alpha (EUP)

    denom = jnp.sum(num, axis=1, keepdims=True)              # (TN, 1)
    # Exact division (not approx reciprocal): keeps row sums == 1 to f32 accuracy.
    q_ref[...] = (num / denom).astype(q_ref.dtype)


def cluster_assignment(z: jax.Array, centroids: jax.Array,
                       alpha: float = 1.0, block_n: int = 1024) -> jax.Array:
    """Student's-t soft assignment. z: (N, D), centroids: (K, D) -> q: (N, K)."""
    N, D = z.shape
    K, D2 = centroids.shape
    assert D == D2, "hidden_dim mismatch between z and centroids"

    z = z.astype(jnp.float32)
    c = centroids.astype(jnp.float32)

    # Hoisted once: ||c_k||^2 as a (1, K) row, stays VMEM-resident.
    cn2 = jnp.sum(c * c, axis=1)[None, :]                    # (1, K)

    block_n = min(block_n, N)
    grid_n = pl.cdiv(N, block_n)

    power = (float(alpha) + 1.0) / 2.0
    needs_pow = (power != 1.0) and not float(power).is_integer()

    kernel = functools.partial(_cluster_assignment_kernel, alpha=float(alpha))

    return pl.pallas_call(
        kernel,
        out_shape=jax.ShapeDtypeStruct((N, K), jnp.float32),
        grid_spec=pltpu.PrefetchScalarGridSpec(
            num_scalar_prefetch=0,
            grid=(grid_n,),
            in_specs=[
                pl.BlockSpec((block_n, D), lambda i: (i, 0)),  # z: streamed over N
                pl.BlockSpec((K, D), lambda i: (0, 0)),        # centroids: resident
                pl.BlockSpec((1, K), lambda i: (0, 0)),        # ||c||^2: resident
            ],
            out_specs=pl.BlockSpec((block_n, K), lambda i: (i, 0)),
        ),
        compiler_params=pltpu.CompilerParams(
            # Independent N-tiles: shard the grid across TensorCores where available.
            dimension_semantics=("parallel",),
        ),
        cost_estimate=pl.CostEstimate(
            flops=2 * N * K * D + 2 * N * D + 8 * N * K,
            transcendentals=(2 * N * K) if needs_pow else 0,
            bytes_accessed=4 * (N * D + K * D + K + N * K),
        ),
    )(z, c, cn2)


def xavier_uniform(key, shape, dtype=jnp.float32):
    """Matches torch.nn.init.xavier_uniform_ for a 2-D (fan_out, fan_in) tensor."""
    fan_out, fan_in = shape
    bound = (6.0 / (fan_in + fan_out)) ** 0.5
    return jax.random.uniform(key, shape, dtype=dtype, minval=-bound, maxval=bound)


def reference(z, centroids, alpha=1.0):
    """Direct transcription of the PyTorch ClusterAssignment.forward."""
    diff = jnp.sum((z[:, None, :] - centroids[None, :, :]) ** 2, axis=2)
    numerator = 1.0 / (1.0 + diff / alpha)
    numerator = numerator ** ((alpha + 1.0) / 2.0)
    return numerator / jnp.sum(numerator, axis=1, keepdims=True)


if __name__ == "__main__":
    key = jax.random.PRNGKey(0)
    k_z, k_c = jax.random.split(key)

    num_cluster = 16
    hidden_dim = 32
    n_samples = 8
    alpha = 1.0

    # Deterministic synthetic parameters + inputs. `z` plays the role of the
    # encoder output (DEC.encoder is an arbitrary user autoencoder, not part of
    # this kernel).
    centroids = xavier_uniform(k_c, (num_cluster, hidden_dim))
    z = jax.random.normal(k_z, (n_samples, hidden_dim), dtype=jnp.float32)

    q = cluster_assignment(z, centroids, alpha=alpha)
    q = jax.block_until_ready(q)

    q_ref = reference(z, centroids, alpha=alpha)
    assert q.shape == (n_samples, num_cluster)
    # The MXU identity (||z||^2 + ||c||^2 - 2 z.c^T) reorders the D-summation
    # relative to the pure-broadcast reference; 1e-4 comfortably covers that.
    assert jnp.allclose(q, q_ref, atol=1e-4, rtol=1e-4), "mismatch vs reference"
    assert jnp.allclose(jnp.sum(q, axis=1), 1.0, atol=1e-5), "rows must sum to 1"

    print("KERNEL_OK")
</pallas_src>

<mosaic_0001>
module attributes {stable_mosaic.version = 11 : i64} {
  func.func @_cluster_assignment_kernel(%arg0: i32, %arg1: memref<8x32xf32, #tpu.memory_space<vmem>>, %arg2: memref<16x32xf32, #tpu.memory_space<vmem>>, %arg3: memref<1x16xf32, #tpu.memory_space<vmem>>, %arg4: memref<8x16xf32, #tpu.memory_space<vmem>>) attributes {dimension_semantics = [#tpu.dimension_semantics<parallel>], iteration_bounds = array<i64: 1>, scalar_prefetch = 0 : i64, scratch_operands = 0 : i64, tpu.core_type = #tpu.core_type<tc>, window_params = [{transform_indices = @transform_0, window_bounds = array<i64: 8, 32>}, {pipeline_mode = #tpu.pipeline_mode<synchronous>, transform_indices = @transform_1, window_bounds = array<i64: 16, 32>}, {pipeline_mode = #tpu.pipeline_mode<synchronous>, transform_indices = @transform_2, window_bounds = array<i64: 1, 16>}, {transform_indices = @transform_3, window_bounds = array<i64: 8, 16>}]} {
    %c0 = arith.constant 0 : index
    %c0_0 = arith.constant 0 : index
    %0 = vector.load %arg1[%c0, %c0_0] : memref<8x32xf32, #tpu.memory_space<vmem>>, vector<8x32xf32>
    %c0_1 = arith.constant 0 : index
    %c0_2 = arith.constant 0 : index
    %1 = vector.load %arg2[%c0_1, %c0_2] : memref<16x32xf32, #tpu.memory_space<vmem>>, vector<16x32xf32>
    %c0_3 = arith.constant 0 : index
    %c0_4 = arith.constant 0 : index
    %2 = vector.load %arg3[%c0_3, %c0_4] : memref<1x16xf32, #tpu.memory_space<vmem>>, vector<1x16xf32>
    %3 = arith.mulf %0, %0 : vector<8x32xf32>
    %cst = arith.constant dense<0.000000e+00> : vector<8xf32>
    %4 = vector.multi_reduction <add>, %3, %cst [1] : vector<8x32xf32> to vector<8xf32>
    %5 = vector.shape_cast %4 : vector<8xf32> to vector<8x1xf32>
    %cst_5 = arith.constant dense<0.000000e+00> : vector<8x16xf32>
    %6 = tpu.matmul %0, %1, %cst_5 {dimension_numbers = #tpu.dot_dimension_numbers<[1], [1], [0], [0], [0, 0, 1, 0], [], []>, precision = #tpu.contract_precision<fp32>} : vector<8x32xf32>, vector<16x32xf32>, vector<8x16xf32> -> vector<8x16xf32>
    %7 = vector.broadcast %5 : vector<8x1xf32> to vector<8x16xf32>
    %8 = vector.broadcast %2 : vector<1x16xf32> to vector<8x16xf32>
    %9 = arith.addf %7, %8 : vector<8x16xf32>
    %cst_6 = arith.constant 2.000000e+00 : f32
    %10 = vector.broadcast %cst_6 : f32 to vector<8x16xf32>
    %11 = arith.mulf %10, %6 : vector<8x16xf32>
    %12 = arith.subf %9, %11 : vector<8x16xf32>
    %cst_7 = arith.constant 0.000000e+00 : f32
    %13 = vector.broadcast %cst_7 : f32 to vector<8x16xf32>
    %14 = arith.maximumf %12, %13 : vector<8x16xf32>
    %cst_8 = arith.constant 1.000000e+00 : f32
    %15 = vector.broadcast %cst_8 : f32 to vector<8x16xf32>
    %16 = arith.addf %15, %14 : vector<8x16xf32>
    %cst_9 = arith.constant 1.000000e+00 : f32
    %17 = vector.broadcast %cst_9 : f32 to vector<8x16xf32>
    %18 = arith.divf %17, %16 : vector<8x16xf32>
    %cst_10 = arith.constant dense<0.000000e+00> : vector<8xf32>
    %19 = vector.multi_reduction <add>, %18, %cst_10 [1] : vector<8x16xf32> to vector<8xf32>
    %20 = vector.shape_cast %19 : vector<8xf32> to vector<8x1xf32>
    %21 = vector.broadcast %20 : vector<8x1xf32> to vector<8x16xf32>
    %22 = arith.divf %18, %21 : vector<8x16xf32>
    %c0_11 = arith.constant 0 : index
    %c0_12 = arith.constant 0 : index
    %23 = vector.load %arg4[%c0_11, %c0_12] : memref<8x16xf32, #tpu.memory_space<vmem>>, vector<8x16xf32>
    tpu.vector_store %arg4[%c0_11, %c0_12], %22 {strides = array<i32>} : memref<8x16xf32, #tpu.memory_space<vmem>>, vector<8x16xf32>,
    return
  }
  func.func @transform_0(%arg0: i32) -> (i32, i32) {
    %c0_i32 = arith.constant 0 : i32
    %c0_i32_0 = arith.constant 0 : i32
    return %arg0, %c0_i32 : i32, i32
  }
  func.func @transform_1(%arg0: i32) -> (i32, i32) {
    %c0_i32 = arith.constant 0 : i32
    %c0_i32_0 = arith.constant 0 : i32
    %c0_i32_1 = arith.constant 0 : i32
    return %c0_i32, %c0_i32_0 : i32, i32
  }
  func.func @transform_2(%arg0: i32) -> (i32, i32) {
    %c0_i32 = arith.constant 0 : i32
    %c0_i32_0 = arith.constant 0 : i32
    %c0_i32_1 = arith.constant 0 : i32
    return %c0_i32, %c0_i32_0 : i32, i32
  }
  func.func @transform_3(%arg0: i32) -> (i32, i32) {
    %c0_i32 = arith.constant 0 : i32
    %c0_i32_0 = arith.constant 0 : i32
    return %arg0, %c0_i32 : i32, i32
  }
}

</mosaic_0001>

<llo_original>
// kernel: tpu_custom_call.1
$region0: #{tpu_custom_call.1}
  #allocation0 [shape = 'u32[]', space=smem, size = 0x4, offset = 0x4, fixed_abs, tag = 'smem constant byte address 0x4 - core index']
  #allocation1 [shape = 'u32[144,128]{1,0:T(1,128)}', space=vmem, size = 0x12000, scoped, tag = 'internal scratch']
  %s0 = inlined_call_operand.hbm [shape: f32[8,32], index: 0, kind: input, shape index: {}]
  %s1 = inlined_call_operand.hbm [shape: f32[16,32], index: 1, kind: input, shape index: {}]
  %s2 = inlined_call_operand.vmem [shape: f32[1,16], index: 2, kind: input, shape index: {}]
  %s3 = inlined_call_operand.hbm [shape: f32[8,16], index: 3, kind: output, shape index: {}]
  %s4 = sld [smem:[#allocation0]]
  $region30: #{tpu_custom_call.1} parent=0
    _
  %s6 = ssub.s32 1, %s4
  %s7 = scalar_select 0, %s6, %s4
  $region1: #{tpu_custom_call.1} parent=0
    #allocation2 [shape = 'u8[4096]{0}', space=vmem, size = 0x1000, scoped, tag = 'input window, operand 0, single buffered']
    #allocation3 [shape = 's32[1]{0}', space=sflag, size = 0x4, scoped, tag = 'scoped memory for tpu_custom_call.1']
    #allocation4 [shape = 's32[1]{0}', space=sflag, size = 0x4, scoped, tag = 'scoped memory for tpu_custom_call.1']
    #allocation5 [shape = 'u8[8192]{0}', space=vmem, size = 0x2000, scoped, tag = 'input window, operand 1, single buffered']
    #allocation6 [shape = 's32[1]{0}', space=sflag, size = 0x4, scoped, tag = 'scoped memory for tpu_custom_call.1']
    #allocation7 [shape = 'u8[4096]{0}', space=vmem, size = 0x1000, scoped, tag = 'output window, operand 0, single buffered']
    %8 = vsyncpa [#allocation3], 0
    %9 = vsyncpa [#allocation6], 0
    %10 = vsyncpa [#allocation4], 0
    // Predicated region
    $region2: #{tpu_custom_call.1} parent=1 // pred_check
      _
    $region3: #{tpu_custom_call.1} parent=1 // pred_check_branch
      %12 = sbr.rel (0) target = $region5
    $region4: #{tpu_custom_call.1} parent=1 // pred_region
      %s14 = ssub.s32 128, 128
      %15 = vsyncadd [#allocation3], %s14
      %s17 = sshll.u32 [#allocation2], 4
      %s18 = int_to_ptr.vmem [resolvable:$true] %s17
      %20 = dma.hbm_to_vmem [thread:$0]  %s0, 128, %s18, [#allocation3]
    $region5: #{tpu_custom_call.1} parent=1 // pred_fallthru
      _
    // Predicated region
    $region6: #{tpu_custom_call.1} parent=1 // pred_check
      _
    $region7: #{tpu_custom_call.1} parent=1 // pred_check_branch
      %22 = sbr.rel (0) target = $region9
    $region8: #{tpu_custom_call.1} parent=1 // pred_region
      %s24 = ssub.s32 256, 256
      %25 = vsyncadd [#allocation6], %s24
      %s26 = sshll.u32 [#allocation5], 4
      %s27 = int_to_ptr.vmem [resolvable:$true] %s26
      %32 = dma.hbm_to_vmem [thread:$0]  %s1, 256, %s27, [#allocation6], 128, 128, 8
    $region9: #{tpu_custom_call.1} parent=1 // pred_fallthru
      _
    // Predicated region
    $region10: #{tpu_custom_call.1} parent=1 // pred_check
      _
    $region11: #{tpu_custom_call.1} parent=1 // pred_check_branch
      %34 = sbr.rel (0) target = $region13
    $region12: #{tpu_custom_call.1} parent=1 // pred_region
      _
    $region13: #{tpu_custom_call.1} parent=1 // pred_fallthru
      _
    // Predicated region
    $region14: #{tpu_custom_call.1} parent=1 // pred_check
      _
    $region15: #{tpu_custom_call.1} parent=1 // pred_check_branch
      %36 = sbr.rel (0) target = $region17
    $region16: #{tpu_custom_call.1} parent=1 // pred_region
      %37 = dma.done [#allocation3], 128
    $region17: #{tpu_custom_call.1} parent=1 // pred_fallthru
      _
    // Predicated region
    $region18: #{tpu_custom_call.1} parent=1 // pred_check
      _
    $region19: #{tpu_custom_call.1} parent=1 // pred_check_branch
      %39 = sbr.rel (0) target = $region21
    $region20: #{tpu_custom_call.1} parent=1 // pred_region
      %40 = dma.done [#allocation6], 256
    $region21: #{tpu_custom_call.1} parent=1 // pred_fallthru
      _
    %v41 = vld [vmem:[#allocation2] sm:$0xff]
    %v42 = vld [vmem:[#allocation5] sm:$0xff]
    %v43 = vld [vmem:[#allocation5 + $0x8] sm:$0xff]
    %v44 = vld [vmem:[%s2] sm:$0x1]
    %v45 = vmul.f32 %v41, %v41
    %vm46 = vcmask 261120
    %v47 = vsel %vm46, %v45, 0.0
    %48 = vadd.xlane.f32.xlu0 %v47
    %v49 = vpop.xlane.xlu0 %48
    %v51 = vsel %vm46, %v41, 0
    %v54 = vsel %vm46, %v42, 0
    %v57 = vsel %vm46, %v43, 0
    %59 = vmatprep.subr.mxu0 0.0
    %v60 = vand.u32 %v54, 4294901760
    %61 = vmatpush1.xpose.msra.mxu0 %v60
    %62 = vmatprep.subr.mxu0 0.0
    %v63 = vand.u32 %v57, 4294901760
    %64 = vmatpush1.xpose.msra.mxu0 %v63
    %65 = vmatprep.subr.mxu0 0.0
    %66 = vmatpush1.xpose.msra.mxu0 0.0
    %67 = vmatprep.subr.mxu0 0.0
    %68 = vmatpush1.xpose.msra.mxu0 0.0
    %69 = vmatprep.subr.mxu0 0.0
    %70 = vmatpush1.xpose.msra.mxu0 0.0
    %71 = vmatprep.subr.mxu0 0.0
    %72 = vmatpush1.xpose.msra.mxu0 0.0
    %73 = vmatprep.subr.mxu0 0.0
    %74 = vmatpush1.xpose.msra.mxu0 0.0
    %75 = vmatprep.subr.mxu0 0.0
    %76 = vmatpush1.xpose.msra.mxu0 0.0
    %77 = vmatprep.subr.mxu0 0.0
    %78 = vmatpush1.xpose.msra.mxu0 0.0
    %79 = vmatprep.subr.mxu0 0.0
    %80 = vmatpush1.xpose.msra.mxu0 0.0
    %81 = vmatprep.subr.mxu0 0.0
    %82 = vmatpush1.xpose.msra.mxu0 0.0
    %83 = vmatprep.subr.mxu0 0.0
    %84 = vmatpush1.xpose.msra.mxu0 0.0
    %85 = vmatprep.subr.mxu0 0.0
    %86 = vmatpush1.xpose.msra.mxu0 0.0
    %87 = vmatprep.subr.mxu0 0.0
    %88 = vmatpush1.xpose.msra.mxu0 0.0
    %89 = vmatprep.subr.mxu0 0.0
    %90 = vmatpush1.xpose.msra.mxu0 0.0
    %91 = vmatprep.subr.mxu0 0.0
    %92 = vmatpush1.xpose.msra.mxu0 0.0
    %93 = vmatprep.subr.mxu0 0.0
    %94 = vmatpush1.xpose.msra.mxu0 0.0
    %95 = vmatprep.subr.mxu0 0.0
    %96 = vmatpush1.xpose.msra.mxu0 0.0
    %97 = vmatprep.subr.mxu0 0.0
    %98 = vmatpush1.xpose.msra.mxu0 0.0
    %99 = vmatprep.subr.mxu0 0.0
    %100 = vmatpush1.xpose.msra.mxu0 0.0
    %101 = vmatprep.subr.mxu0 0.0
    %102 = vmatpush1.xpose.msra.mxu0 0.0
    %103 = vmatprep.subr.mxu0 0.0
    %104 = vmatpush1.xpose.msra.mxu0 0.0
    %105 = vmatprep.subr.mxu0 0.0
    %106 = vmatpush1.xpose.msra.mxu0 0.0
    %107 = vmatprep.subr.mxu0 0.0
    %108 = vmatpush1.xpose.msra.mxu0 0.0
    %109 = vmatprep.subr.mxu0 0.0
    %110 = vmatpush1.xpose.msra.mxu0 0.0
    %111 = vmatprep.subr.mxu0 0.0
    %112 = vmatpush1.xpose.msra.mxu0 0.0
    %113 = vmatprep.subr.mxu0 0.0
    %114 = vmatpush1.xpose.msra.mxu0 0.0
    %115 = vmatprep.subr.mxu0 0.0
    %116 = vmatpush1.xpose.msra.mxu0 0.0
    %117 = vmatprep.subr.mxu0 0.0
    %118 = vmatpush1.xpose.msra.mxu0 0.0
    %119 = vmatprep.subr.mxu0 0.0
    %120 = vmatpush1.xpose.msra.mxu0 0.0
    %121 = vmatprep.subr.mxu0 0.0
    %122 = vmatpush1.xpose.msra.mxu0 0.0
    %123 = vmatprep.subr.mxu0 0.0
    %124 = vmatpush1.xpose.msra.mxu0 0.0
    %125 = vmatprep.mubr.f32.mxu0 0.0
    %v126 = vand.u32 %v51, 4294901760
    %v127 = vsub.f32 %v51, %v126
    %v128 = vand.u32 %v127, 4294901760
    %v129 = vsub.f32 %v127, %v128
    %v130 = vand.u32 %v129, 4294901760
    %131 = vmatmul.mubr.f32.gmra.mrb[0].mxu0 %v130
    %v132 = vpop.f32.mrb[0].mxu0
    %v133 = vadd.f32 0.0, %v132
    %v134 = vpop.f32.mrb[0].mxu0
    %135 = vdwg.mxu0
    %136 = vmatprep.subr.mxu0 0.0
    %v137 = vand.u32 %v54, 4294901760
    %v138 = vsub.f32 %v54, %v137
    %v139 = vand.u32 %v138, 4294901760
    %v140 = vsub.f32 %v138, %v139
    %v141 = vand.u32 %v140, 4294901760
    %142 = vmatpush1.xpose.msra.mxu0 %v141
    %143 = vmatprep.subr.mxu0 0.0
    %v144 = vand.u32 %v57, 4294901760
    %v145 = vsub.f32 %v57, %v144
    %v146 = vand.u32 %v145, 4294901760
    %v147 = vsub.f32 %v145, %v146
    %v148 = vand.u32 %v147, 4294901760
    %149 = vmatpush1.xpose.msra.mxu0 %v148
    %150 = vmatprep.subr.mxu0 0.0
    %151 = vmatpush1.xpose.msra.mxu0 0.0
    %152 = vmatprep.subr.mxu0 0.0
    %153 = vmatpush1.xpose.msra.mxu0 0.0
    %154 = vmatprep.subr.mxu0 0.0
    %155 = vmatpush1.xpose.msra.mxu0 0.0
    %156 = vmatprep.subr.mxu0 0.0
    %157 = vmatpush1.xpose.msra.mxu0 0.0
    %158 = vmatprep.subr.mxu0 0.0
    %159 = vmatpush1.xpose.msra.mxu0 0.0
    %160 = vmatprep.subr.mxu0 0.0
    %161 = vmatpush1.xpose.msra.mxu0 0.0
    %162 = vmatprep.subr.mxu0 0.0
    %163 = vmatpush1.xpose.msra.mxu0 0.0
    %164 = vmatprep.subr.mxu0 0.0
    %165 = vmatpush1.xpose.msra.mxu0 0.0
    %166 = vmatprep.subr.mxu0 0.0
    %167 = vmatpush1.xpose.msra.mxu0 0.0
    %168 = vmatprep.subr.mxu0 0.0
    %169 = vmatpush1.xpose.msra.mxu0 0.0
    %170 = vmatprep.subr.mxu0 0.0
    %171 = vmatpush1.xpose.msra.mxu0 0.0
    %172 = vmatprep.subr.mxu0 0.0
    %173 = vmatpush1.xpose.msra.mxu0 0.0
    %174 = vmatprep.subr.mxu0 0.0
    %175 = vmatpush1.xpose.msra.mxu0 0.0
    %176 = vmatprep.subr.mxu0 0.0
    %177 = vmatpush1.xpose.msra.mxu0 0.0
    %178 = vmatprep.subr.mxu0 0.0
    %179 = vmatpush1.xpose.msra.mxu0 0.0
    %180 = vmatprep.subr.mxu0 0.0
    %181 = vmatpush1.xpose.msra.mxu0 0.0
    %182 = vmatprep.subr.mxu0 0.0
    %183 = vmatpush1.xpose.msra.mxu0 0.0
    %184 = vmatprep.subr.mxu0 0.0
    %185 = vmatpush1.xpose.msra.mxu0 0.0
    %186 = vmatprep.subr.mxu0 0.0
    %187 = vmatpush1.xpose.msra.mxu0 0.0
    %188 = vmatprep.subr.mxu0 0.0
    %189 = vmatpush1.xpose.msra.mxu0 0.0
    %190 = vmatprep.subr.mxu0 0.0
    %191 = vmatpush1.xpose.msra.mxu0 0.0
    %192 = vmatprep.subr.mxu0 0.0
    %193 = vmatpush1.xpose.msra.mxu0 0.0
    %194 = vmatprep.subr.mxu0 0.0
    %195 = vmatpush1.xpose.msra.mxu0 0.0
    %196 = vmatprep.subr.mxu0 0.0
    %197 = vmatpush1.xpose.msra.mxu0 0.0
    %198 = vmatprep.subr.mxu0 0.0
    %199 = vmatpush1.xpose.msra.mxu0 0.0
    %200 = vmatprep.subr.mxu0 0.0
    %201 = vmatpush1.xpose.msra.mxu0 0.0
    %202 = vmatprep.subr.mxu0 0.0
    %203 = vmatpush1.xpose.msra.mxu0 0.0
    %204 = vmatprep.subr.mxu0 0.0
    %205 = vmatpush1.xpose.msra.mxu0 0.0
    %206 = vmatprep.subr.mxu0 0.0
    %207 = vmatpush1.xpose.msra.mxu0 0.0
    %208 = vmatprep.subr.mxu0 0.0
    %209 = vmatpush1.xpose.msra.mxu0 0.0
    %210 = vmatprep.mubr.f32.mxu0 0.0
    %v211 = vand.u32 %v51, 4294901760
    %212 = vmatmul.mubr.f32.gmra.mrb[0].mxu0 %v211
    %v213 = vpop.f32.mrb[0].mxu0
    %v214 = vadd.f32 %v133, %v213
    %v215 = vpop.f32.mrb[0].mxu0
    %216 = vdwg.mxu0
    %217 = vmatprep.subr.mxu0 0.0
    %v218 = vand.u32 %v54, 4294901760
    %v219 = vsub.f32 %v54, %v218
    %220 = vmatpush1.xpose.msra.mxu0 %v219
    %221 = vmatprep.subr.mxu0 0.0
    %v222 = vand.u32 %v57, 4294901760
    %v223 = vsub.f32 %v57, %v222
    %224 = vmatpush1.xpose.msra.mxu0 %v223
    %225 = vmatprep.subr.mxu0 0.0
    %226 = vmatpush1.xpose.msra.mxu0 0.0
    %227 = vmatprep.subr.mxu0 0.0
    %228 = vmatpush1.xpose.msra.mxu0 0.0
    %229 = vmatprep.subr.mxu0 0.0
    %230 = vmatpush1.xpose.msra.mxu0 0.0
    %231 = vmatprep.subr.mxu0 0.0
    %232 = vmatpush1.xpose.msra.mxu0 0.0
    %233 = vmatprep.subr.mxu0 0.0
    %234 = vmatpush1.xpose.msra.mxu0 0.0
    %235 = vmatprep.subr.mxu0 0.0
    %236 = vmatpush1.xpose.msra.mxu0 0.0
    %237 = vmatprep.subr.mxu0 0.0
    %238 = vmatpush1.xpose.msra.mxu0 0.0
    %239 = vmatprep.subr.mxu0 0.0
    %240 = vmatpush1.xpose.msra.mxu0 0.0
    %241 = vmatprep.subr.mxu0 0.0
    %242 = vmatpush1.xpose.msra.mxu0 0.0
    %243 = vmatprep.subr.mxu0 0.0
    %244 = vmatpush1.xpose.msra.mxu0 0.0
    %245 = vmatprep.subr.mxu0 0.0
    %246 = vmatpush1.xpose.msra.mxu0 0.0
    %247 = vmatprep.subr.mxu0 0.0
    %248 = vmatpush1.xpose.msra.mxu0 0.0
    %249 = vmatprep.subr.mxu0 0.0
    %250 = vmatpush1.xpose.msra.mxu0 0.0
    %251 = vmatprep.subr.mxu0 0.0
    %252 = vmatpush1.xpose.msra.mxu0 0.0
    %253 = vmatprep.subr.mxu0 0.0
    %254 = vmatpush1.xpose.msra.mxu0 0.0
    %255 = vmatprep.subr.mxu0 0.0
    %256 = vmatpush1.xpose.msra.mxu0 0.0
    %257 = vmatprep.subr.mxu0 0.0
    %258 = vmatpush1.xpose.msra.mxu0 0.0
    %259 = vmatprep.subr.mxu0 0.0
    %260 = vmatpush1.xpose.msra.mxu0 0.0
    %261 = vmatprep.subr.mxu0 0.0
    %262 = vmatpush1.xpose.msra.mxu0 0.0
    %263 = vmatprep.subr.mxu0 0.0
    %264 = vmatpush1.xpose.msra.mxu0 0.0
    %265 = vmatprep.subr.mxu0 0.0
    %266 = vmatpush1.xpose.msra.mxu0 0.0
    %267 = vmatprep.subr.mxu0 0.0
    %268 = vmatpush1.xpose.msra.mxu0 0.0
    %269 = vmatprep.subr.mxu0 0.0
    %270 = vmatpush1.xpose.msra.mxu0 0.0
    %271 = vmatprep.subr.mxu0 0.0
    %272 = vmatpush1.xpose.msra.mxu0 0.0
    %273 = vmatprep.subr.mxu0 0.0
    %274 = vmatpush1.xpose.msra.mxu0 0.0
    %275 = vmatprep.subr.mxu0 0.0
    %276 = vmatpush1.xpose.msra.mxu0 0.0
    %277 = vmatprep.subr.mxu0 0.0
    %278 = vmatpush1.xpose.msra.mxu0 0.0
    %279 = vmatprep.subr.mxu0 0.0
    %280 = vmatpush1.xpose.msra.mxu0 0.0
    %281 = vmatprep.subr.mxu0 0.0
    %282 = vmatpush1.xpose.msra.mxu0 0.0
    %283 = vmatprep.subr.mxu0 0.0
    %284 = vmatpush1.xpose.msra.mxu0 0.0
    %285 = vmatprep.mubr.f32.mxu0 0.0
    %v286 = vand.u32 %v51, 4294901760
    %v287 = vsub.f32 %v51, %v286
    %288 = vmatmul.mubr.f32.gmra.mrb[0].mxu0 %v287
    %v289 = vpop.f32.mrb[0].mxu0
    %v290 = vadd.f32 %v214, %v289
    %v291 = vpop.f32.mrb[0].mxu0
    %292 = vdwg.mxu0
    %293 = vmatprep.subr.mxu0 0.0
    %v294 = vand.u32 %v54, 4294901760
    %295 = vmatpush1.xpose.msra.mxu0 %v294
    %296 = vmatprep.subr.mxu0 0.0
    %v297 = vand.u32 %v57, 4294901760
    %298 = vmatpush1.xpose.msra.mxu0 %v297
    %299 = vmatprep.subr.mxu0 0.0
    %300 = vmatpush1.xpose.msra.mxu0 0.0
    %301 = vmatprep.subr.mxu0 0.0
    %302 = vmatpush1.xpose.msra.mxu0 0.0
    %303 = vmatprep.subr.mxu0 0.0
    %304 = vmatpush1.xpose.msra.mxu0 0.0
    %305 = vmatprep.subr.mxu0 0.0
    %306 = vmatpush1.xpose.msra.mxu0 0.0
    %307 = vmatprep.subr.mxu0 0.0
    %308 = vmatpush1.xpose.msra.mxu0 0.0
    %309 = vmatprep.subr.mxu0 0.0
    %310 = vmatpush1.xpose.msra.mxu0 0.0
    %311 = vmatprep.subr.mxu0 0.0
    %312 = vmatpush1.xpose.msra.mxu0 0.0
    %313 = vmatprep.subr.mxu0 0.0
    %314 = vmatpush1.xpose.msra.mxu0 0.0
    %315 = vmatprep.subr.mxu0 0.0
    %316 = vmatpush1.xpose.msra.mxu0 0.0
    %317 = vmatprep.subr.mxu0 0.0
    %318 = vmatpush1.xpose.msra.mxu0 0.0
    %319 = vmatprep.subr.mxu0 0.0
    %320 = vmatpush1.xpose.msra.mxu0 0.0
    %321 = vmatprep.subr.mxu0 0.0
    %322 = vmatpush1.xpose.msra.mxu0 0.0
    %323 = vmatprep.subr.mxu0 0.0
    %324 = vmatpush1.xpose.msra.mxu0 0.0
    %325 = vmatprep.subr.mxu0 0.0
    %326 = vmatpush1.xpose.msra.mxu0 0.0
    %327 = vmatprep.subr.mxu0 0.0
    %328 = vmatpush1.xpose.msra.mxu0 0.0
    %329 = vmatprep.subr.mxu0 0.0
    %330 = vmatpush1.xpose.msra.mxu0 0.0
    %331 = vmatprep.subr.mxu0 0.0
    %332 = vmatpush1.xpose.msra.mxu0 0.0
    %333 = vmatprep.subr.mxu0 0.0
    %334 = vmatpush1.xpose.msra.mxu0 0.0
    %335 = vmatprep.subr.mxu0 0.0
    %336 = vmatpush1.xpose.msra.mxu0 0.0
    %337 = vmatprep.subr.mxu0 0.0
    %338 = vmatpush1.xpose.msra.mxu0 0.0
    %339 = vmatprep.subr.mxu0 0.0
    %340 = vmatpush1.xpose.msra.mxu0 0.0
    %341 = vmatprep.subr.mxu0 0.0
    %342 = vmatpush1.xpose.msra.mxu0 0.0
    %343 = vmatprep.subr.mxu0 0.0
    %344 = vmatpush1.xpose.msra.mxu0 0.0
    %345 = vmatprep.subr.mxu0 0.0
    %346 = vmatpush1.xpose.msra.mxu0 0.0
    %347 = vmatprep.subr.mxu0 0.0
    %348 = vmatpush1.xpose.msra.mxu0 0.0
    %349 = vmatprep.subr.mxu0 0.0
    %350 = vmatpush1.xpose.msra.mxu0 0.0
    %351 = vmatprep.subr.mxu0 0.0
    %352 = vmatpush1.xpose.msra.mxu0 0.0
    %353 = vmatprep.subr.mxu0 0.0
    %354 = vmatpush1.xpose.msra.mxu0 0.0
    %355 = vmatprep.subr.mxu0 0.0
    %356 = vmatpush1.xpose.msra.mxu0 0.0
    %357 = vmatprep.subr.mxu0 0.0
    %358 = vmatpush1.xpose.msra.mxu0 0.0
    %359 = vmatprep.mubr.f32.mxu0 0.0
    %v360 = vand.u32 %v51, 4294901760
    %v361 = vsub.f32 %v51, %v360
    %v362 = vand.u32 %v361, 4294901760
    %363 = vmatmul.mubr.f32.gmra.mrb[0].mxu0 %v362
    %v364 = vpop.f32.mrb[0].mxu0
    %v365 = vadd.f32 %v290, %v364
    %v366 = vpop.f32.mrb[0].mxu0
    %367 = vdwg.mxu0
    %368 = vmatprep.subr.mxu0 0.0
    %v369 = vand.u32 %v54, 4294901760
    %v370 = vsub.f32 %v54, %v369
    %v371 = vand.u32 %v370, 4294901760
    %372 = vmatpush1.xpose.msra.mxu0 %v371
    %373 = vmatprep.subr.mxu0 0.0
    %v374 = vand.u32 %v57, 4294901760
    %v375 = vsub.f32 %v57, %v374
    %v376 = vand.u32 %v375, 4294901760
    %377 = vmatpush1.xpose.msra.mxu0 %v376
    %378 = vmatprep.subr.mxu0 0.0
    %379 = vmatpush1.xpose.msra.mxu0 0.0
    %380 = vmatprep.subr.mxu0 0.0
    %381 = vmatpush1.xpose.msra.mxu0 0.0
    %382 = vmatprep.subr.mxu0 0.0
    %383 = vmatpush1.xpose.msra.mxu0 0.0
    %384 = vmatprep.subr.mxu0 0.0
    %385 = vmatpush1.xpose.msra.mxu0 0.0
    %386 = vmatprep.subr.mxu0 0.0
    %387 = vmatpush1.xpose.msra.mxu0 0.0
    %388 = vmatprep.subr.mxu0 0.0
    %389 = vmatpush1.xpose.msra.mxu0 0.0
    %390 = vmatprep.subr.mxu0 0.0
    %391 = vmatpush1.xpose.msra.mxu0 0.0
    %392 = vmatprep.subr.mxu0 0.0
    %393 = vmatpush1.xpose.msra.mxu0 0.0
    %394 = vmatprep.subr.mxu0 0.0
    %395 = vmatpush1.xpose.msra.mxu0 0.0
    %396 = vmatprep.subr.mxu0 0.0
    %397 = vmatpush1.xpose.msra.mxu0 0.0
    %398 = vmatprep.subr.mxu0 0.0
    %399 = vmatpush1.xpose.msra.mxu0 0.0
    %400 = vmatprep.subr.mxu0 0.0
    %401 = vmatpush1.xpose.msra.mxu0 0.0
    %402 = vmatprep.subr.mxu0 0.0
    %403 = vmatpush1.xpose.msra.mxu0 0.0
    %404 = vmatprep.subr.mxu0 0.0
    %405 = vmatpush1.xpose.msra.mxu0 0.0
    %406 = vmatprep.subr.mxu0 0.0
    %407 = vmatpush1.xpose.msra.mxu0 0.0
    %408 = vmatprep.subr.mxu0 0.0
    %409 = vmatpush1.xpose.msra.mxu0 0.0
    %410 = vmatprep.subr.mxu0 0.0
    %411 = vmatpush1.xpose.msra.mxu0 0.0
    %412 = vmatprep.subr.mxu0 0.0
    %413 = vmatpush1.xpose.msra.mxu0 0.0
    %414 = vmatprep.subr.mxu0 0.0
    %415 = vmatpush1.xpose.msra.mxu0 0.0
    %416 = vmatprep.subr.mxu0 0.0
    %417 = vmatpush1.xpose.msra.mxu0 0.0
    %418 = vmatprep.subr.mxu0 0.0
    %419 = vmatpush1.xpose.msra.mxu0 0.0
    %420 = vmatprep.subr.mxu0 0.0
    %421 = vmatpush1.xpose.msra.mxu0 0.0
    %422 = vmatprep.subr.mxu0 0.0
    %423 = vmatpush1.xpose.msra.mxu0 0.0
    %424 = vmatprep.subr.mxu0 0.0
    %425 = vmatpush1.xpose.msra.mxu0 0.0
    %426 = vmatprep.subr.mxu0 0.0
    %427 = vmatpush1.xpose.msra.mxu0 0.0
    %428 = vmatprep.subr.mxu0 0.0
    %429 = vmatpush1.xpose.msra.mxu0 0.0
    %430 = vmatprep.subr.mxu0 0.0
    %431 = vmatpush1.xpose.msra.mxu0 0.0
    %432 = vmatprep.subr.mxu0 0.0
    %433 = vmatpush1.xpose.msra.mxu0 0.0
    %434 = vmatprep.subr.mxu0 0.0
    %435 = vmatpush1.xpose.msra.mxu0 0.0
    %436 = vmatprep.subr.mxu0 0.0
    %437 = vmatpush1.xpose.msra.mxu0 0.0
    %438 = vmatprep.mubr.f32.mxu0 0.0
    %v439 = vand.u32 %v51, 4294901760
    %440 = vmatmul.mubr.f32.gmra.mrb[0].mxu0 %v439
    %v441 = vpop.f32.mrb[0].mxu0
    %v442 = vadd.f32 %v365, %v441
    %v443 = vpop.f32.mrb[0].mxu0
    %444 = vdwg.mxu0
    %445 = vmatprep.subr.mxu0 0.0
    %v446 = vand.u32 %v54, 4294901760
    %447 = vmatpush1.xpose.msra.mxu0 %v446
    %448 = vmatprep.subr.mxu0 0.0
    %v449 = vand.u32 %v57, 4294901760
    %450 = vmatpush1.xpose.msra.mxu0 %v449
    %451 = vmatprep.subr.mxu0 0.0
    %452 = vmatpush1.xpose.msra.mxu0 0.0
    %453 = vmatprep.subr.mxu0 0.0
    %454 = vmatpush1.xpose.msra.mxu0 0.0
    %455 = vmatprep.subr.mxu0 0.0
    %456 = vmatpush1.xpose.msra.mxu0 0.0
    %457 = vmatprep.subr.mxu0 0.0
    %458 = vmatpush1.xpose.msra.mxu0 0.0
    %459 = vmatprep.subr.mxu0 0.0
    %460 = vmatpush1.xpose.msra.mxu0 0.0
    %461 = vmatprep.subr.mxu0 0.0
    %462 = vmatpush1.xpose.msra.mxu0 0.0
    %463 = vmatprep.subr.mxu0 0.0
    %464 = vmatpush1.xpose.msra.mxu0 0.0
    %465 = vmatprep.subr.mxu0 0.0
    %466 = vmatpush1.xpose.msra.mxu0 0.0
    %467 = vmatprep.subr.mxu0 0.0
    %468 = vmatpush1.xpose.msra.mxu0 0.0
    %469 = vmatprep.subr.mxu0 0.0
    %470 = vmatpush1.xpose.msra.mxu0 0.0
    %471 = vmatprep.subr.mxu0 0.0
    %472 = vmatpush1.xpose.msra.mxu0 0.0
    %473 = vmatprep.subr.mxu0 0.0
    %474 = vmatpush1.xpose.msra.mxu0 0.0
    %475 = vmatprep.subr.mxu0 0.0
    %476 = vmatpush1.xpose.msra.mxu0 0.0
    %477 = vmatprep.subr.mxu0 0.0
    %478 = vmatpush1.xpose.msra.mxu0 0.0
    %479 = vmatprep.subr.mxu0 0.0
    %480 = vmatpush1.xpose.msra.mxu0 0.0
    %481 = vmatprep.subr.mxu0 0.0
    %482 = vmatpush1.xpose.msra.mxu0 0.0
    %483 = vmatprep.subr.mxu0 0.0
    %484 = vmatpush1.xpose.msra.mxu0 0.0
    %485 = vmatprep.subr.mxu0 0.0
    %486 = vmatpush1.xpose.msra.mxu0 0.0
    %487 = vmatprep.subr.mxu0 0.0
    %488 = vmatpush1.xpose.msra.mxu0 0.0
    %489 = vmatprep.subr.mxu0 0.0
    %490 = vmatpush1.xpose.msra.mxu0 0.0
    %491 = vmatprep.subr.mxu0 0.0
    %492 = vmatpush1.xpose.msra.mxu0 0.0
    %493 = vmatprep.subr.mxu0 0.0
    %494 = vmatpush1.xpose.msra.mxu0 0.0
    %495 = vmatprep.subr.mxu0 0.0
    %496 = vmatpush1.xpose.msra.mxu0 0.0
    %497 = vmatprep.subr.mxu0 0.0
    %498 = vmatpush1.xpose.msra.mxu0 0.0
    %499 = vmatprep.subr.mxu0 0.0
    %500 = vmatpush1.xpose.msra.mxu0 0.0
    %501 = vmatprep.subr.mxu0 0.0
    %502 = vmatpush1.xpose.msra.mxu0 0.0
    %503 = vmatprep.subr.mxu0 0.0
    %504 = vmatpush1.xpose.msra.mxu0 0.0
    %505 = vmatprep.subr.mxu0 0.0
    %506 = vmatpush1.xpose.msra.mxu0 0.0
    %507 = vmatprep.subr.mxu0 0.0
    %508 = vmatpush1.xpose.msra.mxu0 0.0
    %509 = vmatprep.subr.mxu0 0.0
    %510 = vmatpush1.xpose.msra.mxu0 0.0
    %511 = vmatprep.mubr.f32.mxu0 0.0
    %v512 = vand.u32 %v51, 4294901760
    %513 = vmatmul.mubr.f32.gmra.mrb[0].mxu0 %v512
    %v514 = vpop.f32.mrb[0].mxu0
    %v515 = vadd.f32 %v442, %v514
    %v516 = vpop.f32.mrb[0].mxu0
    %517 = vdwg.mxu0
    %v519 = vlaneseq
    %v520 = vshrl.u32 %v519, 7
    %v521 = vsub.s32 0, %v520
    %v522 = vrot.slane %v44, %v521
    %v524 = vadd.f32 %v49, %v522
    %v525 = vmul.f32 %v515, 2.0
    %v526 = vsub.f32 %v524, %v525
    %v527 = vmax.f32 %v526, 0.0
    %v528 = vadd.f32 %v527, 1.0
    %v529 = vrcp.pop %v528
    %v530 = vmul.f32 1.0, %v529
    %vm531 = vcmask 130048
    %v532 = vsel %vm531, %v530, 0.0
    %533 = vadd.xlane.f32.xlu0 %v532
    %v534 = vpop.xlane.xlu0 %533
    %v535 = vrcp.pop %v534
    %v536 = vmul.f32 %v530, %v535
    %537 = vst.msk [vmem:[#allocation7] sm:$0xff] %vm531, %v536
    // Predicated region
    $region22: #{tpu_custom_call.1} parent=1 // pred_check
      _
    $region23: #{tpu_custom_call.1} parent=1 // pred_check_branch
      %539 = sbr.rel (0) target = $region25
    $region24: #{tpu_custom_call.1} parent=1 // pred_region
      %s541 = ssub.s32 128, 128
      %542 = vsyncadd [#allocation4], %s541
      %s544 = sshll.u32 [#allocation7], 4
      %s545 = int_to_ptr.vmem [resolvable:$true] %s544
      %547 = dma.vmem_to_hbm [thread:$0]  %s545, 128, %s3, [#allocation4]
    $region25: #{tpu_custom_call.1} parent=1 // pred_fallthru
      _
    // Predicated region
    $region26: #{tpu_custom_call.1} parent=1 // pred_check
      _
    $region27: #{tpu_custom_call.1} parent=1 // pred_check_branch
      %549 = sbr.rel (0) target = $region29
    $region28: #{tpu_custom_call.1} parent=1 // pred_region
      %550 = dma.done [#allocation4], 128
    $region29: #{tpu_custom_call.1} parent=1 // pred_fallthru
      _
    %551 = vsyncpa [#allocation3], 1
    %552 = vsyncpa [#allocation6], 1
    %553 = vsyncpa [#allocation4], 1

</llo_original>
